<compile_context>
chip_gen: v5e
topology: v5e:2x2
jax: 0.10.0
libtpu: 0.0.40
codegen_flags: <defaults>
</compile_context>

<pallas_src>
import functools

import numpy as np
import jax
import jax.numpy as jnp
from jax.experimental import pallas as pl
from jax.experimental.pallas import tpu as pltpu


def _modconv_kernel(w_ref, x_ref, s_ref, d_ref, o_ref, *, tb, k, wp, n):
    """One grid step processes `tb` batch elements.

    w_ref: (K*K, C_out, C_in)  bf16  per-tap base weight (shared; block index constant)
    x_ref: (tb, C_in, SP)      bf16  zero-padded, row-major flattened input
    s_ref: (tb, C_in, 1)       f32   per-batch style (input-channel modulation)
    d_ref: (tb, C_out, 1)      f32   per-batch, per-out-channel demodulation scalars
    o_ref: (tb, C_out, N)      f32   wide-row output, N = H * Wp (wrapper crops junk cols)
    """
    kk = k * k
    # Hoist the small per-tap weight loads out of the batch loop (loop-invariant).
    w_taps = [w_ref[i] for i in range(kk)]

    def one_batch(t, carry):
        # Modulate input channels in f32, then feed the MXU bf16 (f32 accumulation).
        xm = (x_ref[t].astype(jnp.float32) * s_ref[t]).astype(jnp.bfloat16)   # (C_in, SP)
        # K*K shifted matmuls: tap (dy, dx) <-> lane offset dy*Wp + dx on the padded layout.
        acc = jnp.dot(w_taps[0], xm[:, 0:n], preferred_element_type=jnp.float32)
        for idx in range(1, kk):
            dy, dx = idx // k, idx % k
            off = dy * wp + dx
            acc = acc + jnp.dot(w_taps[idx], xm[:, off:off + n],
                                preferred_element_type=jnp.float32)
        # Demodulate output channels (f32) and store the lane-wide slab.
        o_ref[t] = (acc * d_ref[t]).astype(o_ref.dtype)
        return carry

    jax.lax.fori_loop(0, tb, one_batch, None, unroll=True)


def modulated_conv2d(x, s, weight, *, demodulate=True, eps=1e-8):
    """Forward pass of ModulatedConv2d.

    x:      (B, C_in, H, W)
    s:      (B, C_in)
    weight: (C_out, C_in, K, K)   (odd K, padding = K//2, same as the PyTorch module)
    returns (B, C_out, H, W)
    """
    b, c_in, h, w_in = x.shape
    c_out, c_in_w, kh, kw = weight.shape
    assert c_in_w == c_in and kh == kw and kh % 2 == 1, "square odd kernel, matching in_dim"
    k = kh
    pad = k // 2

    x = x.astype(jnp.float32)
    s = s.astype(jnp.float32)
    weight = weight.astype(jnp.float32)

    # Batch-independent pre-normalizations — identical math to the PyTorch module.
    # (Note: the style pre-norm deliberately averages over the whole (B, C_in) tensor,
    #  coupling batch elements, exactly as in the reference module.)
    if demodulate:
        weight = weight * jax.lax.rsqrt(jnp.mean(weight * weight, axis=(1, 2, 3), keepdims=True))
        s = s * jax.lax.rsqrt(jnp.mean(s * s))

    # Demodulation scalars: sum_{c,ky,kx}(w*s)^2 == (sum_{ky,kx} w^2) @ s^2  (tiny f32 matmul).
    if demodulate:
        w2 = jnp.sum(weight * weight, axis=(2, 3))                 # (C_out, C_in)
        d = jax.lax.rsqrt(jnp.dot(s * s, w2.T) + eps)              # (B, C_out)
    else:
        d = jnp.ones((b, c_out), jnp.float32)
    d = d.reshape(b, c_out, 1)
    s3 = s.reshape(b, c_in, 1)

    # Per-tap weight slices for the MXU: w_kk[dy*k+dx, o, c] = weight[o, c, dy, dx]  (bf16).
    w_kk = jnp.transpose(weight, (2, 3, 0, 1)).reshape(k * k, c_out, c_in).astype(jnp.bfloat16)

    # Zero-pad + flatten + bf16-cast x: pure layout prep, one fused XLA pass, no K^2 blowup.
    hp, wp = h + 2 * pad, w_in + 2 * pad
    n = h * wp                                       # matmul N: full padded-width rows
    sp_raw = hp * wp
    sp = -(-(sp_raw + (k - 1)) // 128) * 128         # lane-aligned + K-1 slack for the last slab
    xp = jnp.pad(x, ((0, 0), (0, 0), (pad, pad), (pad, pad)))
    x_flat = jnp.pad(xp.reshape(b, c_in, sp_raw),
                     ((0, 0), (0, 0), (0, sp - sp_raw))).astype(jnp.bfloat16)

    # Batch tile: largest tb that (a) fits a conservative VMEM budget (safe on v7x's 64 MiB)
    # and (b) leaves >= 2 'parallel' grid steps so both v7x TensorCores get work.
    def vmem_estimate(t):
        per_step = t * (c_in * sp * 2 + c_out * n * 4 + (c_in + c_out) * 4)   # x + out + s + d
        fixed = 2 * (k * k * c_out * c_in * 2) + c_out * n * 4 + 2 * c_in * sp * 2
        return 2 * per_step + fixed                  # double-buffered blocks + live temporaries

    budget = 24 * 1024 * 1024
    min_steps = 2 if b >= 2 else 1
    tb = 1
    for cand in range(min(b, 8), 0, -1):
        if b % cand == 0 and b // cand >= min_steps and vmem_estimate(cand) <= budget:
            tb = cand
            break
    nb = b // tb

    kernel = functools.partial(_modconv_kernel, tb=tb, k=k, wp=wp, n=n)

    out_wide = pl.pallas_call(
        kernel,
        out_shape=jax.ShapeDtypeStruct((b, c_out, n), jnp.float32),
        grid_spec=pltpu.PrefetchScalarGridSpec(
            num_scalar_prefetch=0,
            grid=(nb,),
            in_specs=[
                # Shared base weight — block index never changes, so it is not re-fetched
                # per step (at production sizes single-buffer it via pl.Buffered(1)).
                pl.BlockSpec((k * k, c_out, c_in), lambda i: (0, 0, 0)),
                pl.BlockSpec((tb, c_in, sp), lambda i: (i, 0, 0)),     # padded inputs (bf16)
                pl.BlockSpec((tb, c_in, 1), lambda i: (i, 0, 0)),      # styles (f32)
                pl.BlockSpec((tb, c_out, 1), lambda i: (i, 0, 0)),     # demod scalars (f32)
            ],
            out_specs=pl.BlockSpec((tb, c_out, n), lambda i: (i, 0, 0)),
        ),
        compiler_params=pltpu.CompilerParams(
            dimension_semantics=("parallel",),
            vmem_limit_bytes=48 * 1024 * 1024,
        ),
        cost_estimate=pl.CostEstimate(
            flops=2 * b * c_out * c_in * k * k * n,
            transcendentals=0,
            bytes_accessed=2 * (w_kk.size + x_flat.size)
                           + 4 * (s3.size + d.size + b * c_out * n),
        ),
    )(w_kk, x_flat, s3, d)

    # Crop the K-1 junk columns per row of the wide slab -> (B, C_out, H, W).
    out = out_wide.reshape(b, c_out, h, wp)[:, :, :, :w_in]
    return out


def _ref_forward_numpy(x, s, weight, demodulate=True, eps=1e-8):
    """Direct numpy (float64) reference mirroring the PyTorch forward."""
    x = np.asarray(x, dtype=np.float64)
    s = np.asarray(s, dtype=np.float64)
    w = np.asarray(weight, dtype=np.float64)
    b, c, h, wid = x.shape
    out_d, in_d, kh, kw = w.shape
    if demodulate:
        w = w / np.sqrt(np.mean(w ** 2, axis=(1, 2, 3), keepdims=True))
        s = s / np.sqrt(np.mean(s ** 2))
    wb = w[None] * s[:, None, :, None, None]                  # (b, out, in, kh, kw)
    if demodulate:
        wb = wb / np.sqrt(np.sum(wb ** 2, axis=(2, 3, 4), keepdims=True) + eps)
    pad = kh // 2
    xp = np.pad(x, ((0, 0), (0, 0), (pad, pad), (pad, pad)))
    out = np.zeros((b, out_d, h, wid), dtype=np.float64)
    for dy in range(kh):
        for dx in range(kw):
            out += np.einsum('boc,bcij->boij', wb[:, :, :, dy, dx],
                             xp[:, :, dy:dy + h, dx:dx + wid])
    return out.astype(np.float32)


if __name__ == "__main__":
    key = jax.random.PRNGKey(0)
    k_w, k_x, k_s = jax.random.split(key, 3)
    B, C_IN, C_OUT, H, W, K = 2, 16, 32, 16, 16, 3

    weight = jax.random.normal(k_w, (C_OUT, C_IN, K, K), dtype=jnp.float32)
    x = jax.random.normal(k_x, (B, C_IN, H, W), dtype=jnp.float32)
    s = jax.random.normal(k_s, (B, C_IN), dtype=jnp.float32)

    fwd = jax.jit(functools.partial(modulated_conv2d, demodulate=True))
    out = fwd(x, s, weight)
    out = jax.block_until_ready(out)
    assert out.shape == (B, C_OUT, H, W), out.shape

    ref = _ref_forward_numpy(np.asarray(x), np.asarray(s), np.asarray(weight), demodulate=True)
    # Tolerance sized for bf16 MXU inputs (f32 accumulation); real bugs produce O(1) errors.
    np.testing.assert_allclose(np.asarray(out), ref, rtol=5e-2, atol=5e-2)

    print("KERNEL_OK")
</pallas_src>

<mosaic_0001>
module attributes {stable_mosaic.version = 11 : i64} {
  func.func @_modconv_kernel(%arg0: i32, %arg1: memref<9x32x16xbf16, #tpu.memory_space<vmem>>, %arg2: memref<1x16x384xbf16, #tpu.memory_space<vmem>>, %arg3: memref<1x16x1xf32, #tpu.memory_space<vmem>>, %arg4: memref<1x32x1xf32, #tpu.memory_space<vmem>>, %arg5: memref<1x32x288xf32, #tpu.memory_space<vmem>>) attributes {dimension_semantics = [#tpu.dimension_semantics<parallel>], iteration_bounds = array<i64: 2>, scalar_prefetch = 0 : i64, scratch_operands = 0 : i64, tpu.core_type = #tpu.core_type<tc>, window_params = [{pipeline_mode = #tpu.pipeline_mode<synchronous>, transform_indices = @transform_0, window_bounds = array<i64: 9, 32, 16>}, {transform_indices = @transform_1, window_bounds = array<i64: 1, 16, 384>}, {transform_indices = @transform_2, window_bounds = array<i64: 1, 16, 1>}, {transform_indices = @transform_3, window_bounds = array<i64: 1, 32, 1>}, {transform_indices = @transform_4, window_bounds = array<i64: 1, 32, 288>}]} {
    %c0 = arith.constant 0 : index
    %c0_0 = arith.constant 0 : index
    %c0_1 = arith.constant 0 : index
    %0 = vector.load %arg1[%c0, %c0_0, %c0_1] : memref<9x32x16xbf16, #tpu.memory_space<vmem>>, vector<1x32x16xbf16>
    %1 = vector.shape_cast %0 : vector<1x32x16xbf16> to vector<32x16xbf16>
    %c1 = arith.constant 1 : index
    %c0_2 = arith.constant 0 : index
    %c0_3 = arith.constant 0 : index
    %2 = vector.load %arg1[%c1, %c0_2, %c0_3] : memref<9x32x16xbf16, #tpu.memory_space<vmem>>, vector<1x32x16xbf16>
    %3 = vector.shape_cast %2 : vector<1x32x16xbf16> to vector<32x16xbf16>
    %c2 = arith.constant 2 : index
    %c0_4 = arith.constant 0 : index
    %c0_5 = arith.constant 0 : index
    %4 = vector.load %arg1[%c2, %c0_4, %c0_5] : memref<9x32x16xbf16, #tpu.memory_space<vmem>>, vector<1x32x16xbf16>
    %5 = vector.shape_cast %4 : vector<1x32x16xbf16> to vector<32x16xbf16>
    %c3 = arith.constant 3 : index
    %c0_6 = arith.constant 0 : index
    %c0_7 = arith.constant 0 : index
    %6 = vector.load %arg1[%c3, %c0_6, %c0_7] : memref<9x32x16xbf16, #tpu.memory_space<vmem>>, vector<1x32x16xbf16>
    %7 = vector.shape_cast %6 : vector<1x32x16xbf16> to vector<32x16xbf16>
    %c4 = arith.constant 4 : index
    %c0_8 = arith.constant 0 : index
    %c0_9 = arith.constant 0 : index
    %8 = vector.load %arg1[%c4, %c0_8, %c0_9] : memref<9x32x16xbf16, #tpu.memory_space<vmem>>, vector<1x32x16xbf16>
    %9 = vector.shape_cast %8 : vector<1x32x16xbf16> to vector<32x16xbf16>
    %c5 = arith.constant 5 : index
    %c0_10 = arith.constant 0 : index
    %c0_11 = arith.constant 0 : index
    %10 = vector.load %arg1[%c5, %c0_10, %c0_11] : memref<9x32x16xbf16, #tpu.memory_space<vmem>>, vector<1x32x16xbf16>
    %11 = vector.shape_cast %10 : vector<1x32x16xbf16> to vector<32x16xbf16>
    %c6 = arith.constant 6 : index
    %c0_12 = arith.constant 0 : index
    %c0_13 = arith.constant 0 : index
    %12 = vector.load %arg1[%c6, %c0_12, %c0_13] : memref<9x32x16xbf16, #tpu.memory_space<vmem>>, vector<1x32x16xbf16>
    %13 = vector.shape_cast %12 : vector<1x32x16xbf16> to vector<32x16xbf16>
    %c7 = arith.constant 7 : index
    %c0_14 = arith.constant 0 : index
    %c0_15 = arith.constant 0 : index
    %14 = vector.load %arg1[%c7, %c0_14, %c0_15] : memref<9x32x16xbf16, #tpu.memory_space<vmem>>, vector<1x32x16xbf16>
    %15 = vector.shape_cast %14 : vector<1x32x16xbf16> to vector<32x16xbf16>
    %c8 = arith.constant 8 : index
    %c0_16 = arith.constant 0 : index
    %c0_17 = arith.constant 0 : index
    %16 = vector.load %arg1[%c8, %c0_16, %c0_17] : memref<9x32x16xbf16, #tpu.memory_space<vmem>>, vector<1x32x16xbf16>
    %17 = vector.shape_cast %16 : vector<1x32x16xbf16> to vector<32x16xbf16>
    %c0_i32 = arith.constant 0 : i32
    %18 = arith.index_cast %c0_i32 : i32 to index
    %c0_18 = arith.constant 0 : index
    %c0_19 = arith.constant 0 : index
    %19 = vector.load %arg2[%18, %c0_18, %c0_19] : memref<1x16x384xbf16, #tpu.memory_space<vmem>>, vector<1x16x384xbf16>
    %20 = vector.shape_cast %19 : vector<1x16x384xbf16> to vector<16x384xbf16>
    %21 = arith.extf %20 : vector<16x384xbf16> to vector<16x384xf32>
    %22 = arith.index_cast %c0_i32 : i32 to index
    %c0_20 = arith.constant 0 : index
    %c0_21 = arith.constant 0 : index
    %23 = vector.load %arg3[%22, %c0_20, %c0_21] : memref<1x16x1xf32, #tpu.memory_space<vmem>>, vector<1x16x1xf32>
    %24 = vector.shape_cast %23 : vector<1x16x1xf32> to vector<16x1xf32>
    %25 = vector.broadcast %24 : vector<16x1xf32> to vector<16x384xf32>
    %26 = arith.mulf %21, %25 : vector<16x384xf32>
    %27 = arith.truncf %26 : vector<16x384xf32> to vector<16x384xbf16>
    %28 = vector.extract_strided_slice %27 {offsets = [0, 0], sizes = [16, 288], strides = [1, 1]} : vector<16x384xbf16> to vector<16x288xbf16>
    %cst = arith.constant dense<0.000000e+00> : vector<32x288xf32>
    %29 = tpu.matmul %1, %28, %cst {dimension_numbers = #tpu.dot_dimension_numbers<[1], [0], [0], [1], [0, 0, 1, 1], [], []>} : vector<32x16xbf16>, vector<16x288xbf16>, vector<32x288xf32> -> vector<32x288xf32>
    %30 = vector.extract_strided_slice %27 {offsets = [0, 1], sizes = [16, 288], strides = [1, 1]} : vector<16x384xbf16> to vector<16x288xbf16>
    %cst_22 = arith.constant dense<0.000000e+00> : vector<32x288xf32>
    %31 = tpu.matmul %3, %30, %cst_22 {dimension_numbers = #tpu.dot_dimension_numbers<[1], [0], [0], [1], [0, 0, 1, 1], [], []>} : vector<32x16xbf16>, vector<16x288xbf16>, vector<32x288xf32> -> vector<32x288xf32>
    %32 = arith.addf %29, %31 : vector<32x288xf32>
    %33 = vector.extract_strided_slice %27 {offsets = [0, 2], sizes = [16, 288], strides = [1, 1]} : vector<16x384xbf16> to vector<16x288xbf16>
    %cst_23 = arith.constant dense<0.000000e+00> : vector<32x288xf32>
    %34 = tpu.matmul %5, %33, %cst_23 {dimension_numbers = #tpu.dot_dimension_numbers<[1], [0], [0], [1], [0, 0, 1, 1], [], []>} : vector<32x16xbf16>, vector<16x288xbf16>, vector<32x288xf32> -> vector<32x288xf32>
    %35 = arith.addf %32, %34 : vector<32x288xf32>
    %36 = vector.extract_strided_slice %27 {offsets = [0, 18], sizes = [16, 288], strides = [1, 1]} : vector<16x384xbf16> to vector<16x288xbf16>
    %cst_24 = arith.constant dense<0.000000e+00> : vector<32x288xf32>
    %37 = tpu.matmul %7, %36, %cst_24 {dimension_numbers = #tpu.dot_dimension_numbers<[1], [0], [0], [1], [0, 0, 1, 1], [], []>} : vector<32x16xbf16>, vector<16x288xbf16>, vector<32x288xf32> -> vector<32x288xf32>
    %38 = arith.addf %35, %37 : vector<32x288xf32>
    %39 = vector.extract_strided_slice %27 {offsets = [0, 19], sizes = [16, 288], strides = [1, 1]} : vector<16x384xbf16> to vector<16x288xbf16>
    %cst_25 = arith.constant dense<0.000000e+00> : vector<32x288xf32>
    %40 = tpu.matmul %9, %39, %cst_25 {dimension_numbers = #tpu.dot_dimension_numbers<[1], [0], [0], [1], [0, 0, 1, 1], [], []>} : vector<32x16xbf16>, vector<16x288xbf16>, vector<32x288xf32> -> vector<32x288xf32>
    %41 = arith.addf %38, %40 : vector<32x288xf32>
    %42 = vector.extract_strided_slice %27 {offsets = [0, 20], sizes = [16, 288], strides = [1, 1]} : vector<16x384xbf16> to vector<16x288xbf16>
    %cst_26 = arith.constant dense<0.000000e+00> : vector<32x288xf32>
    %43 = tpu.matmul %11, %42, %cst_26 {dimension_numbers = #tpu.dot_dimension_numbers<[1], [0], [0], [1], [0, 0, 1, 1], [], []>} : vector<32x16xbf16>, vector<16x288xbf16>, vector<32x288xf32> -> vector<32x288xf32>
    %44 = arith.addf %41, %43 : vector<32x288xf32>
    %45 = vector.extract_strided_slice %27 {offsets = [0, 36], sizes = [16, 288], strides = [1, 1]} : vector<16x384xbf16> to vector<16x288xbf16>
    %cst_27 = arith.constant dense<0.000000e+00> : vector<32x288xf32>
    %46 = tpu.matmul %13, %45, %cst_27 {dimension_numbers = #tpu.dot_dimension_numbers<[1], [0], [0], [1], [0, 0, 1, 1], [], []>} : vector<32x16xbf16>, vector<16x288xbf16>, vector<32x288xf32> -> vector<32x288xf32>
    %47 = arith.addf %44, %46 : vector<32x288xf32>
    %48 = vector.extract_strided_slice %27 {offsets = [0, 37], sizes = [16, 288], strides = [1, 1]} : vector<16x384xbf16> to vector<16x288xbf16>
    %cst_28 = arith.constant dense<0.000000e+00> : vector<32x288xf32>
    %49 = tpu.matmul %15, %48, %cst_28 {dimension_numbers = #tpu.dot_dimension_numbers<[1], [0], [0], [1], [0, 0, 1, 1], [], []>} : vector<32x16xbf16>, vector<16x288xbf16>, vector<32x288xf32> -> vector<32x288xf32>
    %50 = arith.addf %47, %49 : vector<32x288xf32>
    %51 = vector.extract_strided_slice %27 {offsets = [0, 38], sizes = [16, 288], strides = [1, 1]} : vector<16x384xbf16> to vector<16x288xbf16>
    %cst_29 = arith.constant dense<0.000000e+00> : vector<32x288xf32>
    %52 = tpu.matmul %17, %51, %cst_29 {dimension_numbers = #tpu.dot_dimension_numbers<[1], [0], [0], [1], [0, 0, 1, 1], [], []>} : vector<32x16xbf16>, vector<16x288xbf16>, vector<32x288xf32> -> vector<32x288xf32>
    %53 = arith.addf %50, %52 : vector<32x288xf32>
    %54 = arith.index_cast %c0_i32 : i32 to index
    %c0_30 = arith.constant 0 : index
    %c0_31 = arith.constant 0 : index
    %55 = vector.load %arg4[%54, %c0_30, %c0_31] : memref<1x32x1xf32, #tpu.memory_space<vmem>>, vector<1x32x1xf32>
    %56 = vector.shape_cast %55 : vector<1x32x1xf32> to vector<32x1xf32>
    %57 = vector.broadcast %56 : vector<32x1xf32> to vector<32x288xf32>
    %58 = arith.mulf %53, %57 : vector<32x288xf32>
    %59 = arith.index_cast %c0_i32 : i32 to index
    %c0_32 = arith.constant 0 : index
    %c0_33 = arith.constant 0 : index
    %60 = vector.load %arg5[%59, %c0_32, %c0_33] : memref<1x32x288xf32, #tpu.memory_space<vmem>>, vector<1x32x288xf32>
    %61 = vector.shape_cast %60 : vector<1x32x288xf32> to vector<32x288xf32>
    %62 = vector.shape_cast %58 : vector<32x288xf32> to vector<1x32x288xf32>
    tpu.vector_store %arg5[%59, %c0_32, %c0_33], %62 {strides = array<i32>} : memref<1x32x288xf32, #tpu.memory_space<vmem>>, vector<1x32x288xf32>,
    %c1_i32 = arith.constant 1 : i32
    return
  }
  func.func @transform_0(%arg0: i32) -> (i32, i32, i32) {
    %c0_i32 = arith.constant 0 : i32
    %c0_i32_0 = arith.constant 0 : i32
    %c0_i32_1 = arith.constant 0 : i32
    %c0_i32_2 = arith.constant 0 : i32
    return %c0_i32, %c0_i32_0, %c0_i32_1 : i32, i32, i32
  }
  func.func @transform_1(%arg0: i32) -> (i32, i32, i32) {
    %c0_i32 = arith.constant 0 : i32
    %c0_i32_0 = arith.constant 0 : i32
    %c0_i32_1 = arith.constant 0 : i32
    return %arg0, %c0_i32, %c0_i32_0 : i32, i32, i32
  }
  func.func @transform_2(%arg0: i32) -> (i32, i32, i32) {
    %c0_i32 = arith.constant 0 : i32
    %c0_i32_0 = arith.constant 0 : i32
    %c0_i32_1 = arith.constant 0 : i32
    return %arg0, %c0_i32, %c0_i32_0 : i32, i32, i32
  }
  func.func @transform_3(%arg0: i32) -> (i32, i32, i32) {
    %c0_i32 = arith.constant 0 : i32
    %c0_i32_0 = arith.constant 0 : i32
    %c0_i32_1 = arith.constant 0 : i32
    return %arg0, %c0_i32, %c0_i32_0 : i32, i32, i32
  }
  func.func @transform_4(%arg0: i32) -> (i32, i32, i32) {
    %c0_i32 = arith.constant 0 : i32
    %c0_i32_0 = arith.constant 0 : i32
    %c0_i32_1 = arith.constant 0 : i32
    return %arg0, %c0_i32, %c0_i32_0 : i32, i32, i32
  }
}

</mosaic_0001>

<llo_original>
// kernel: modulated_conv2d.1
$region0: #{modulated_conv2d.1}
  #allocation0 [shape = 'u32[]', space=smem, size = 0x4, offset = 0x4, fixed_abs, tag = 'smem constant byte address 0x4 - core index']
  #allocation1 [shape = 'u32[72,128]{1,0:T(1,128)}', space=vmem, size = 0x9000, scoped, tag = 'internal scratch']
  %s0 = inlined_call_operand.vmem [shape: bf16[9,32,16], index: 0, kind: input, shape index: {}]
  %s1 = inlined_call_operand.vmem [shape: bf16[2,16,384], index: 1, kind: input, shape index: {}]
  %s2 = inlined_call_operand.vmem [shape: f32[2,16,1], index: 2, kind: input, shape index: {}]
  %s3 = inlined_call_operand.vmem [shape: f32[2,32,1], index: 3, kind: input, shape index: {}]
  %s4 = inlined_call_operand.vmem [shape: f32[2,32,288], index: 4, kind: output, shape index: {}]
  %s5 = sld [smem:[#allocation0]]
  $region49: #{modulated_conv2d.1} parent=0
    _
  %s7 = ssub.s32 1, %s5
  %s8 = scalar_select 0, %s7, %s5
  loop: start=0, step=1, limit=4
  $region2: #{modulated_conv2d.1} parent=0 // loop_pre_header
    _
  $region3: #{modulated_conv2d.1} parent=0 // loop_header
    %s10 = sphi 0, %s14
    %p11 = scmp.ge.s32.totalorder %s10, 4
    %s18 = sphi 0, %s18
    %s20 = sphi 0, %s18
    %s21 = sphi 0, %s20
    %s35 = sphi 0, %s21
    %s41 = sphi 0, %s43
    %s44 = sphi 0, %s41
    %s45 = sphi 0, %s44
    %s61 = sphi 0, %s45
    %s67 = sphi 0, %s69
    %s70 = sphi 0, %s67
    %s71 = sphi 0, %s70
    %s87 = sphi 0, %s71
    %s93 = sphi 0, %s95
    %s96 = sphi 0, %s93
    %s97 = sphi 0, %s96
    %s113 = sphi 0, %s97
    %s119 = sphi 0, %s121
    %s122 = sphi 0, %s119
    %s123 = sphi 0, %s122
    %s139 = sphi 0, %s123
  $region4: #{modulated_conv2d.1} parent=0 // loop_header_branch
    %13 = sbr.rel (%p11) target = $region8
  $region5: #{modulated_conv2d.1} parent=0 // loop_body
    %s15 = ssub.s32 %s10, 1
    %s16 = ssub.s32 %s10, 2
    %s17 = sadd.s32 %s10, 1
    %s19 = sadd.s32 %s18, 1
    %p22 = scmp.eq.s32.totalorder %s10, 1
    %p23 = scmp.ne.s32.totalorder %s18, %s20
    %p24 = scmp.eq.s32.totalorder %s10, 0
    %p25 = por %p23, %p24
    %p26 = scmp.ne.s32.totalorder %s18, %s20
    %p27 = scmp.eq.s32.totalorder %s15, 1
    %p28 = por %p26, %p27
    %p29 = scmp.ne.s32.totalorder %s20, %s21
    %p30 = scmp.eq.s32.totalorder %s15, 0
    %p31 = por %p29, %p30
    %p32 = scmp.ne.s32.totalorder %s20, %s21
    %p33 = scmp.eq.s32.totalorder %s16, 1
    %p34 = por %p32, %p33
    %p36 = scmp.ne.s32.totalorder %s21, %s35
    %p37 = scmp.eq.s32.totalorder %s16, 0
    %p38 = por %p36, %p37
    %s39 = ssub.s32 %s10, %s17
    %p40 = scmp.eq.s32.totalorder %s39, 0
    %s42 = sadd.s32 %s41, 1
    %s43 = scalar_select %p40, %s41, %s42
    %p46 = pneg %p40
    %p47 = scmp.eq.s32.totalorder %s10, 1
    %p48 = por %p46, %p47
    %p49 = scmp.ne.s32.totalorder %s41, %s44
    %p50 = scmp.eq.s32.totalorder %s10, 0
    %p51 = por %p49, %p50
    %p52 = scmp.ne.s32.totalorder %s41, %s44
    %p53 = scmp.eq.s32.totalorder %s15, 1
    %p54 = por %p52, %p53
    %p55 = scmp.ne.s32.totalorder %s44, %s45
    %p56 = scmp.eq.s32.totalorder %s15, 0
    %p57 = por %p55, %p56
    %p58 = scmp.ne.s32.totalorder %s44, %s45
    %p59 = scmp.eq.s32.totalorder %s16, 1
    %p60 = por %p58, %p59
    %p62 = scmp.ne.s32.totalorder %s45, %s61
    %p63 = scmp.eq.s32.totalorder %s16, 0
    %p64 = por %p62, %p63
    %s65 = ssub.s32 %s10, %s17
    %p66 = scmp.eq.s32.totalorder %s65, 0
    %s68 = sadd.s32 %s67, 1
    %s69 = scalar_select %p66, %s67, %s68
    %p72 = pneg %p66
    %p73 = scmp.eq.s32.totalorder %s10, 1
    %p74 = por %p72, %p73
    %p75 = scmp.ne.s32.totalorder %s67, %s70
    %p76 = scmp.eq.s32.totalorder %s10, 0
    %p77 = por %p75, %p76
    %p78 = scmp.ne.s32.totalorder %s67, %s70
    %p79 = scmp.eq.s32.totalorder %s15, 1
    %p80 = por %p78, %p79
    %p81 = scmp.ne.s32.totalorder %s70, %s71
    %p82 = scmp.eq.s32.totalorder %s15, 0
    %p83 = por %p81, %p82
    %p84 = scmp.ne.s32.totalorder %s70, %s71
    %p85 = scmp.eq.s32.totalorder %s16, 1
    %p86 = por %p84, %p85
    %p88 = scmp.ne.s32.totalorder %s71, %s87
    %p89 = scmp.eq.s32.totalorder %s16, 0
    %p90 = por %p88, %p89
    %s91 = ssub.s32 %s10, %s17
    %p92 = scmp.eq.s32.totalorder %s91, 0
    %s94 = sadd.s32 %s93, 1
    %s95 = scalar_select %p92, %s93, %s94
    %p98 = pneg %p92
    %p99 = scmp.eq.s32.totalorder %s10, 1
    %p100 = por %p98, %p99
    %p101 = scmp.ne.s32.totalorder %s93, %s96
    %p102 = scmp.eq.s32.totalorder %s10, 0
    %p103 = por %p101, %p102
    %p104 = scmp.ne.s32.totalorder %s93, %s96
    %p105 = scmp.eq.s32.totalorder %s15, 1
    %p106 = por %p104, %p105
    %p107 = scmp.ne.s32.totalorder %s96, %s97
    %p108 = scmp.eq.s32.totalorder %s15, 0
    %p109 = por %p107, %p108
    %p110 = scmp.ne.s32.totalorder %s96, %s97
    %p111 = scmp.eq.s32.totalorder %s16, 1
    %p112 = por %p110, %p111
    %p114 = scmp.ne.s32.totalorder %s97, %s113
    %p115 = scmp.eq.s32.totalorder %s16, 0
    %p116 = por %p114, %p115
    %s117 = ssub.s32 %s10, %s17
    %p118 = scmp.eq.s32.totalorder %s117, 0
    %s120 = sadd.s32 %s119, 1
    %s121 = scalar_select %p118, %s119, %s120
    %p124 = pneg %p118
    %p125 = scmp.eq.s32.totalorder %s10, 1
    %p126 = por %p124, %p125
    %p127 = scmp.ne.s32.totalorder %s119, %s122
    %p128 = scmp.eq.s32.totalorder %s10, 0
    %p129 = por %p127, %p128
    %p130 = scmp.ne.s32.totalorder %s119, %s122
    %p131 = scmp.eq.s32.totalorder %s15, 1
    %p132 = por %p130, %p131
    %p133 = scmp.ne.s32.totalorder %s122, %s123
    %p134 = scmp.eq.s32.totalorder %s15, 0
    %p135 = por %p133, %p134
    %p136 = scmp.ne.s32.totalorder %s122, %s123
    %p137 = scmp.eq.s32.totalorder %s16, 1
    %p138 = por %p136, %p137
    %p140 = scmp.ne.s32.totalorder %s123, %s139
    %p141 = scmp.eq.s32.totalorder %s16, 0
    %p142 = por %p140, %p141
    %p143 = scmp.le.s32.totalorder 1, %s10
    %p144 = scmp.lt.s32.totalorder %s10, 3
    %p145 = pnand %p143, %p144
    %p146 = pneg %p145
    // Predicated region
    $region9: #{modulated_conv2d.1} parent=5 // pred_check
      _
    $region10: #{modulated_conv2d.1} parent=5 // pred_check_branch
      %148 = sbr.rel (%p145) target = $region12
    $region11: #{modulated_conv2d.1} parent=5 // pred_region
      %s149 = ssub.s32 %s10, 1
      // Predicated region
      $region13: #{modulated_conv2d.1} parent=11 // pred_check
        %p150 = pneg %p31
      $region14: #{modulated_conv2d.1} parent=11 // pred_check_branch
        %152 = sbr.rel (%p150) target = $region16
      $region15: #{modulated_conv2d.1} parent=11 // pred_region
        _
      $region16: #{modulated_conv2d.1} parent=11 // pred_fallthru
        _
    $region12: #{modulated_conv2d.1} parent=5 // pred_fallthru
      _
    %p153 = scmp.lt.s32.totalorder %s10, 2
    // Predicated region
    $region17: #{modulated_conv2d.1} parent=5 // pred_check
      %p154 = pneg %p153
    $region18: #{modulated_conv2d.1} parent=5 // pred_check_branch
      %156 = sbr.rel (%p154) target = $region20
    $region19: #{modulated_conv2d.1} parent=5 // pred_region
      // Predicated region
      $region21: #{modulated_conv2d.1} parent=19 // pred_check
        %p157 = pneg %p51
      $region22: #{modulated_conv2d.1} parent=19 // pred_check_branch
        %159 = sbr.rel (%p157) target = $region24
      $region23: #{modulated_conv2d.1} parent=19 // pred_region
        %p160 = scmp.lt.s32.totalorder %s10, 1
        %s161 = scalar_select %p160, %s10, 1
        %s162 = smul.addr %s161, 6
        %s163 = smul.addr %s162, 4
        %s164 = scalar_lea.vmem %s1, %s163
      $region24: #{modulated_conv2d.1} parent=19 // pred_fallthru
        _
      // Predicated region
      $region25: #{modulated_conv2d.1} parent=19 // pred_check
        %p165 = pneg %p77
      $region26: #{modulated_conv2d.1} parent=19 // pred_check_branch
        %167 = sbr.rel (%p165) target = $region28
      $region27: #{modulated_conv2d.1} parent=19 // pred_region
        %p168 = scmp.lt.s32.totalorder %s10, 1
        %s169 = scalar_select %p168, %s10, 1
        %s170 = smul.addr %s169, 2
        %s171 = smul.addr %s170, 8
        %s172 = scalar_lea.vmem %s2, %s171
      $region28: #{modulated_conv2d.1} parent=19 // pred_fallthru
        _
      // Predicated region
      $region29: #{modulated_conv2d.1} parent=19 // pred_check
        %p173 = pneg %p103
      $region30: #{modulated_conv2d.1} parent=19 // pred_check_branch
        %175 = sbr.rel (%p173) target = $region32
      $region31: #{modulated_conv2d.1} parent=19 // pred_region
        %p176 = scmp.lt.s32.totalorder %s10, 1
        %s177 = scalar_select %p176, %s10, 1
        %s178 = smul.addr %s177, 4
        %s179 = smul.addr %s178, 8
        %s180 = scalar_lea.vmem %s3, %s179
      $region32: #{modulated_conv2d.1} parent=19 // pred_fallthru
        _
    $region20: #{modulated_conv2d.1} parent=5 // pred_fallthru
      _
    %p181 = scmp.le.s32.totalorder 1, %s10
    %p182 = scmp.lt.s32.totalorder %s10, 3
    %p183 = pnand %p181, %p182
    %p184 = pneg %p183
    // Predicated region
    $region33: #{modulated_conv2d.1} parent=5 // pred_check
      _
    $region34: #{modulated_conv2d.1} parent=5 // pred_check_branch
      %186 = sbr.rel (%p183) target = $region36
    $region35: #{modulated_conv2d.1} parent=5 // pred_region
      %s187 = ssub.s32 %s10, 1
      %p188 = pneg %p31
      %p189 = pneg %p28
      %p190 = scmp.lt.s32.totalorder %s15, 1
      %s191 = scalar_select %p190, %s15, 1
      %s192 = smul.addr %s191, 6
      %s193 = smul.addr %s192, 4
      %s194 = scalar_lea.vmem %s1, %s193
      %p195 = pneg %p57
      %p196 = pneg %p54
      %p197 = scmp.lt.s32.totalorder %s15, 1
      %s198 = scalar_select %p197, %s15, 1
      %s199 = smul.addr %s198, 2
      %s200 = smul.addr %s199, 8
      %s201 = scalar_lea.vmem %s2, %s200
      %p202 = pneg %p83
      %p203 = pneg %p80
      %p204 = scmp.lt.s32.totalorder %s15, 1
      %s205 = scalar_select %p204, %s15, 1
      %s206 = smul.addr %s205, 4
      %s207 = smul.addr %s206, 8
      %s208 = scalar_lea.vmem %s3, %s207
      %p209 = pneg %p109
      %p210 = pneg %p106
      %p211 = pneg %p135
      %p212 = pneg %p132
      %p213 = scmp.lt.s32.totalorder %s15, 1
      %s214 = scalar_select %p213, %s15, 1
      %s215 = smul.addr %s214, 12
      %s216 = smul.addr %s215, 8
      %s217 = scalar_lea.vmem %s4, %s216
      %p218 = scmp.lt.s32.totalorder %s15, 1
      %s219 = scalar_select %p218, %s15, 1
      %s220 = smul.addr %s219, 6
      %s221 = smul.addr %s220, 4
      %s222 = scalar_lea.vmem %s1, %s221
      %p223 = scmp.lt.s32.totalorder %s15, 1
      %s224 = scalar_select %p223, %s15, 1
      %s225 = smul.addr %s224, 2
      %s226 = smul.addr %s225, 8
      %s227 = scalar_lea.vmem %s2, %s226
      %p228 = scmp.lt.s32.totalorder %s15, 1
      %s229 = scalar_select %p228, %s15, 1
      %s230 = smul.addr %s229, 4
      %s231 = smul.addr %s230, 8
      %s232 = scalar_lea.vmem %s3, %s231
      %p233 = scmp.lt.s32.totalorder %s15, 1
      %s234 = scalar_select %p233, %s15, 1
      %s235 = smul.addr %s234, 12
      %s236 = smul.addr %s235, 8
      %s237 = scalar_lea.vmem %s4, %s236
      %v239 = vld [vmem:[%s0] sm:$0xf]
      %v240 = vld [vmem:[%s0 + $0x4] sm:$0xf]
      %v241 = vld [vmem:[%s0 + $0x8] sm:$0xf]
      %v242 = vld [vmem:[%s0 + $0xc] sm:$0xf]
      %s243 = scalar_lea.vmem %s0, 16
      %v244 = vld [vmem:[%s243] sm:$0xf]
      %v245 = vld [vmem:[%s243 + $0x4] sm:$0xf]
      %v246 = vld [vmem:[%s243 + $0x8] sm:$0xf]
      %v247 = vld [vmem:[%s243 + $0xc] sm:$0xf]
      %s248 = scalar_lea.vmem %s0, 32
      %v249 = vld [vmem:[%s248] sm:$0xf]
      %v250 = vld [vmem:[%s248 + $0x4] sm:$0xf]
      %v251 = vld [vmem:[%s248 + $0x8] sm:$0xf]
      %v252 = vld [vmem:[%s248 + $0xc] sm:$0xf]
      %s253 = scalar_lea.vmem %s0, 48
      %v254 = vld [vmem:[%s253] sm:$0xf]
      %v255 = vld [vmem:[%s253 + $0x4] sm:$0xf]
      %v256 = vld [vmem:[%s253 + $0x8] sm:$0xf]
      %v257 = vld [vmem:[%s253 + $0xc] sm:$0xf]
      %s258 = scalar_lea.vmem %s0, 64
      %v259 = vld [vmem:[%s258] sm:$0xf]
      %v260 = vld [vmem:[%s258 + $0x4] sm:$0xf]
      %v261 = vld [vmem:[%s258 + $0x8] sm:$0xf]
      %v262 = vld [vmem:[%s258 + $0xc] sm:$0xf]
      %s263 = scalar_lea.vmem %s0, 80
      %v264 = vld [vmem:[%s263] sm:$0xf]
      %v265 = vld [vmem:[%s263 + $0x4] sm:$0xf]
      %v266 = vld [vmem:[%s263 + $0x8] sm:$0xf]
      %v267 = vld [vmem:[%s263 + $0xc] sm:$0xf]
      %s268 = scalar_lea.vmem %s0, 96
      %v269 = vld [vmem:[%s268] sm:$0xf]
      %v270 = vld [vmem:[%s268 + $0x4] sm:$0xf]
      %v271 = vld [vmem:[%s268 + $0x8] sm:$0xf]
      %v272 = vld [vmem:[%s268 + $0xc] sm:$0xf]
      %s273 = scalar_lea.vmem %s0, 112
      %v274 = vld [vmem:[%s273] sm:$0xf]
      %v275 = vld [vmem:[%s273 + $0x4] sm:$0xf]
      %v276 = vld [vmem:[%s273 + $0x8] sm:$0xf]
      %v277 = vld [vmem:[%s273 + $0xc] sm:$0xf]
      %s278 = scalar_lea.vmem %s0, 128
      %v279 = vld [vmem:[%s278] sm:$0xf]
      %v280 = vld [vmem:[%s278 + $0x4] sm:$0xf]
      %v281 = vld [vmem:[%s278 + $0x8] sm:$0xf]
      %v282 = vld [vmem:[%s278 + $0xc] sm:$0xf]
      %v283 = vld [vmem:[%s222] sm:$0xff]
      %v284 = vld [vmem:[%s222 + $0x8] sm:$0xf]
      %v285 = vld [vmem:[%s222 + $0xc] sm:$0xff]
      %v286 = vld [vmem:[%s222 + $0x14] sm:$0xf]
      %v287 = vunpack.c.l.bf16 %v283
      %v288 = vunpack.c.h.bf16 %v283
      %v289 = vunpack.c.l.bf16 %v284
      %v290 = vunpack.c.l.bf16 %v285
      %v291 = vunpack.c.h.bf16 %v285
      %v292 = vunpack.c.l.bf16 %v286
      %v293 = vld [vmem:[%s227] sm:$0xff]
      %v294 = vld [vmem:[%s227 + $0x8] sm:$0xff]
      %296 = vset.pattern.permute.xlu0 0
      %297 = vperm.xlu0 %296, %v293
      %v298 = vpop.permute.xlu0 %297
      %301 = vset.pattern.permute.xlu0 0
      %302 = vperm.xlu0 %301, %v294
      %v303 = vpop.permute.xlu0 %302
      %v305 = vmul.f32 %v287, %v298
      %v306 = vmul.f32 %v288, %v298
      %v307 = vmul.f32 %v289, %v298
      %v308 = vmul.f32 %v290, %v303
      %v309 = vmul.f32 %v291, %v303
      %v310 = vmul.f32 %v292, %v303
      %v311 = vpack.c.bf16 %v306, %v305
      %v312 = vpack.c.bf16 %v307, %v307
      %v313 = vpack.c.bf16 %v309, %v308
      %v314 = vpack.c.bf16 %v310, %v310
      %v319 = vunpack.c.l.b16 %v244
      %v320 = vunpack.c.l.b16 %v245
      %v321 = vunpack.c.l.b16 %v246
      %v322 = vunpack.c.l.b16 %v247
      %v323 = vpack.c.b16 %v320, %v319
      %v324 = vpack.c.b16 %v322, %v321
      %v329 = vunpack.c.l.b16 %v311
      %v330 = vunpack.c.h.b16 %v311
      %v331 = vunpack.c.l.b16 %v312
      %v332 = vunpack.c.l.b16 %v313
      %v333 = vunpack.c.h.b16 %v313
      %v334 = vunpack.c.l.b16 %v314
      %v335 = vpack.c.b16 %v332, %v329
      %v336 = vpack.c.b16 %v333, %v330
      %v337 = vpack.c.b16 %v334, %v331
      %338 = vrot.lane.b32.xlu0 %v335, 127
      %v339 = vpop.permute.xlu0 %338
      %340 = vrot.lane.b32.xlu0 %v336, 127
      %v341 = vpop.permute.xlu0 %340
      %342 = vrot.lane.b32.xlu0 %v337, 127
      %v343 = vpop.permute.xlu0 %342
      %vm344 = vcmask 1039360
      %v345 = vsel %vm344, %v339, %v341
      %v346 = vsel %vm344, %v341, %v343
      %vm350 = vcmask 130048
      %v352 = vsel %vm350, %v323, 0
      %v355 = vsel %vm350, %v324, 0
      %357 = vmatpush.bf16.msra.mxu0 0
      %358 = vmatpush.bf16.msra.mxu0 0
      %359 = vmatpush.bf16.msra.mxu0 0
      %360 = vmatpush.bf16.msra.mxu0 0
      %361 = vmatpush.bf16.msra.mxu0 0
      %362 = vmatpush.bf16.msra.mxu0 0
      %363 = vmatpush.bf16.msra.mxu0 0
      %364 = vmatpush.bf16.msra.mxu0 %v345
      %365 = vmatmul.bf16.gmra.mxu0 %v352
      %v366 = vpop.f32.mrf.mxu0
      %v367 = vadd.f32 0.0, %v366
      %v368 = vpop.f32.mrf.mxu0
      %v369 = vadd.f32 0.0, %v368
      %370 = vmatmul.bf16.gmra.mxu0 %v355
      %v371 = vpop.f32.mrf.mxu0
      %v372 = vadd.f32 0.0, %v371
      %v373 = vpop.f32.mrf.mxu0
      %v374 = vadd.f32 0.0, %v373
      %375 = vdwg.mxu0
      %376 = vmatpush.bf16.msra.mxu0 0
      %377 = vmatpush.bf16.msra.mxu0 0
      %378 = vmatpush.bf16.msra.mxu0 0
      %379 = vmatpush.bf16.msra.mxu0 0
      %380 = vmatpush.bf16.msra.mxu0 0
      %381 = vmatpush.bf16.msra.mxu0 0
      %382 = vmatpush.bf16.msra.mxu0 0
      %383 = vmatpush.bf16.msra.mxu0 %v346
      %384 = vmatmul.bf16.gmra.mxu0 %v352
      %v385 = vpop.f32.mrf.mxu0
      %v386 = vadd.f32 0.0, %v385
      %v387 = vpop.f32.mrf.mxu0
      %v388 = vadd.f32 0.0, %v387
      %389 = vmatmul.bf16.gmra.mxu0 %v355
      %v390 = vpop.f32.mrf.mxu0
      %v391 = vadd.f32 0.0, %v390
      %v392 = vpop.f32.mrf.mxu0
      %v393 = vadd.f32 0.0, %v392
      %394 = vdwg.mxu0
      %395 = vmatpush.bf16.msra.mxu0 0
      %396 = vmatpush.bf16.msra.mxu0 0
      %397 = vmatpush.bf16.msra.mxu0 0
      %398 = vmatpush.bf16.msra.mxu0 0
      %399 = vmatpush.bf16.msra.mxu0 0
      %400 = vmatpush.bf16.msra.mxu0 0
      %401 = vmatpush.bf16.msra.mxu0 0
      %402 = vmatpush.bf16.msra.mxu0 %v343
      %403 = vmatmul.bf16.gmra.mxu0 %v352
      %v404 = vpop.f32.mrf.mxu0
      %v405 = vadd.f32 0.0, %v404
      %v406 = vpop.f32.mrf.mxu0
      %v407 = vadd.f32 0.0, %v406
      %408 = vmatmul.bf16.gmra.mxu0 %v355
      %v409 = vpop.f32.mrf.mxu0
      %v410 = vadd.f32 0.0, %v409
      %v411 = vpop.f32.mrf.mxu0
      %v412 = vadd.f32 0.0, %v411
      %413 = vdwg.mxu0
      %v418 = vunpack.c.l.b16 %v239
      %v419 = vunpack.c.l.b16 %v240
      %v420 = vunpack.c.l.b16 %v241
      %v421 = vunpack.c.l.b16 %v242
      %v422 = vpack.c.b16 %v419, %v418
      %v423 = vpack.c.b16 %v421, %v420
      %v428 = vsel %vm350, %v422, 0
      %v431 = vsel %vm350, %v423, 0
      %433 = vmatpush.bf16.msra.mxu0 0
      %434 = vmatpush.bf16.msra.mxu0 0
      %435 = vmatpush.bf16.msra.mxu0 0
      %436 = vmatpush.bf16.msra.mxu0 0
      %437 = vmatpush.bf16.msra.mxu0 0
      %438 = vmatpush.bf16.msra.mxu0 0
      %439 = vmatpush.bf16.msra.mxu0 0
      %440 = vmatpush.bf16.msra.mxu0 %v335
      %441 = vmatmul.bf16.gmra.mxu0 %v428
      %v442 = vpop.f32.mrf.mxu0
      %v443 = vadd.f32 %v367, %v442
      %v444 = vpop.f32.mrf.mxu0
      %v445 = vadd.f32 %v369, %v444
      %446 = vmatmul.bf16.gmra.mxu0 %v431
      %v447 = vpop.f32.mrf.mxu0
      %v448 = vadd.f32 %v372, %v447
      %v449 = vpop.f32.mrf.mxu0
      %v450 = vadd.f32 %v374, %v449
      %451 = vdwg.mxu0
      %452 = vmatpush.bf16.msra.mxu0 0
      %453 = vmatpush.bf16.msra.mxu0 0
      %454 = vmatpush.bf16.msra.mxu0 0
      %455 = vmatpush.bf16.msra.mxu0 0
      %456 = vmatpush.bf16.msra.mxu0 0
      %457 = vmatpush.bf16.msra.mxu0 0
      %458 = vmatpush.bf16.msra.mxu0 0
      %459 = vmatpush.bf16.msra.mxu0 %v336
      %460 = vmatmul.bf16.gmra.mxu0 %v428
      %v461 = vpop.f32.mrf.mxu0
      %v462 = vadd.f32 %v386, %v461
      %v463 = vpop.f32.mrf.mxu0
      %v464 = vadd.f32 %v388, %v463
      %465 = vmatmul.bf16.gmra.mxu0 %v431
      %v466 = vpop.f32.mrf.mxu0
      %v467 = vadd.f32 %v391, %v466
      %v468 = vpop.f32.mrf.mxu0
      %v469 = vadd.f32 %v393, %v468
      %470 = vdwg.mxu0
      %471 = vmatpush.bf16.msra.mxu0 0
      %472 = vmatpush.bf16.msra.mxu0 0
      %473 = vmatpush.bf16.msra.mxu0 0
      %474 = vmatpush.bf16.msra.mxu0 0
      %475 = vmatpush.bf16.msra.mxu0 0
      %476 = vmatpush.bf16.msra.mxu0 0
      %477 = vmatpush.bf16.msra.mxu0 0
      %478 = vmatpush.bf16.msra.mxu0 %v337
      %479 = vmatmul.bf16.gmra.mxu0 %v428
      %v480 = vpop.f32.mrf.mxu0
      %v481 = vadd.f32 %v405, %v480
      %v482 = vpop.f32.mrf.mxu0
      %v483 = vadd.f32 %v407, %v482
      %484 = vmatmul.bf16.gmra.mxu0 %v431
      %v485 = vpop.f32.mrf.mxu0
      %v486 = vadd.f32 %v410, %v485
      %v487 = vpop.f32.mrf.mxu0
      %v488 = vadd.f32 %v412, %v487
      %489 = vdwg.mxu0
      %v494 = vunpack.c.l.b16 %v249
      %v495 = vunpack.c.l.b16 %v250
      %v496 = vunpack.c.l.b16 %v251
      %v497 = vunpack.c.l.b16 %v252
      %v498 = vpack.c.b16 %v495, %v494
      %v499 = vpack.c.b16 %v497, %v496
      %500 = vrot.lane.b32.xlu0 %v335, 126
      %v501 = vpop.permute.xlu0 %500
      %502 = vrot.lane.b32.xlu0 %v336, 126
      %v503 = vpop.permute.xlu0 %502
      %504 = vrot.lane.b32.xlu0 %v337, 126
      %v505 = vpop.permute.xlu0 %504
      %vm506 = vcmask 1031168
      %v507 = vsel %vm506, %v501, %v503
      %v508 = vsel %vm506, %v503, %v505
      %v513 = vsel %vm350, %v498, 0
      %v516 = vsel %vm350, %v499, 0
      %518 = vmatpush.bf16.msra.mxu0 0
      %519 = vmatpush.bf16.msra.mxu0 0
      %520 = vmatpush.bf16.msra.mxu0 0
      %521 = vmatpush.bf16.msra.mxu0 0
      %522 = vmatpush.bf16.msra.mxu0 0
      %523 = vmatpush.bf16.msra.mxu0 0
      %524 = vmatpush.bf16.msra.mxu0 0
      %525 = vmatpush.bf16.msra.mxu0 %v507
      %526 = vmatmul.bf16.gmra.mxu0 %v513
      %v527 = vpop.f32.mrf.mxu0
      %v528 = vadd.f32 0.0, %v527
      %v529 = vpop.f32.mrf.mxu0
      %v530 = vadd.f32 0.0, %v529
      %531 = vmatmul.bf16.gmra.mxu0 %v516
      %v532 = vpop.f32.mrf.mxu0
      %v533 = vadd.f32 0.0, %v532
      %v534 = vpop.f32.mrf.mxu0
      %v535 = vadd.f32 0.0, %v534
      %536 = vdwg.mxu0
      %537 = vmatpush.bf16.msra.mxu0 0
      %538 = vmatpush.bf16.msra.mxu0 0
      %539 = vmatpush.bf16.msra.mxu0 0
      %540 = vmatpush.bf16.msra.mxu0 0
      %541 = vmatpush.bf16.msra.mxu0 0
      %542 = vmatpush.bf16.msra.mxu0 0
      %543 = vmatpush.bf16.msra.mxu0 0
      %544 = vmatpush.bf16.msra.mxu0 %v508
      %545 = vmatmul.bf16.gmra.mxu0 %v513
      %v546 = vpop.f32.mrf.mxu0
      %v547 = vadd.f32 0.0, %v546
      %v548 = vpop.f32.mrf.mxu0
      %v549 = vadd.f32 0.0, %v548
      %550 = vmatmul.bf16.gmra.mxu0 %v516
      %v551 = vpop.f32.mrf.mxu0
      %v552 = vadd.f32 0.0, %v551
      %v553 = vpop.f32.mrf.mxu0
      %v554 = vadd.f32 0.0, %v553
      %555 = vdwg.mxu0
      %556 = vmatpush.bf16.msra.mxu0 0
      %557 = vmatpush.bf16.msra.mxu0 0
      %558 = vmatpush.bf16.msra.mxu0 0
      %559 = vmatpush.bf16.msra.mxu0 0
      %560 = vmatpush.bf16.msra.mxu0 0
      %561 = vmatpush.bf16.msra.mxu0 0
      %562 = vmatpush.bf16.msra.mxu0 0
      %563 = vmatpush.bf16.msra.mxu0 %v505
      %564 = vmatmul.bf16.gmra.mxu0 %v513
      %v565 = vpop.f32.mrf.mxu0
      %v566 = vadd.f32 0.0, %v565
      %v567 = vpop.f32.mrf.mxu0
      %v568 = vadd.f32 0.0, %v567
      %569 = vmatmul.bf16.gmra.mxu0 %v516
      %v570 = vpop.f32.mrf.mxu0
      %v571 = vadd.f32 0.0, %v570
      %v572 = vpop.f32.mrf.mxu0
      %v573 = vadd.f32 0.0, %v572
      %574 = vdwg.mxu0
      %v575 = vadd.f32 %v443, %v528
      %v576 = vadd.f32 %v462, %v547
      %v577 = vadd.f32 %v481, %v566
      %v578 = vadd.f32 %v445, %v530
      %v579 = vadd.f32 %v464, %v549
      %v580 = vadd.f32 %v483, %v568
      %v581 = vadd.f32 %v448, %v533
      %v582 = vadd.f32 %v467, %v552
      %v583 = vadd.f32 %v486, %v571
      %v584 = vadd.f32 %v450, %v535
      %v585 = vadd.f32 %v469, %v554
      %v586 = vadd.f32 %v488, %v573
      %v591 = vunpack.c.l.b16 %v254
      %v592 = vunpack.c.l.b16 %v255
      %v593 = vunpack.c.l.b16 %v256
      %v594 = vunpack.c.l.b16 %v257
      %v595 = vpack.c.b16 %v592, %v591
      %v596 = vpack.c.b16 %v594, %v593
      %597 = vrot.lane.b32.xlu0 %v335, 110
      %v598 = vpop.permute.xlu0 %597
      %599 = vrot.lane.b32.xlu0 %v336, 110
      %v600 = vpop.permute.xlu0 %599
      %601 = vrot.lane.b32.xlu0 %v337, 110
      %v602 = vpop.permute.xlu0 %601
      %vm603 = vcmask 900096
      %v604 = vsel %vm603, %v598, %v600
      %v605 = vsel %vm603, %v600, %v602
      %v610 = vsel %vm350, %v595, 0
      %v613 = vsel %vm350, %v596, 0
      %615 = vmatpush.bf16.msra.mxu0 0
      %616 = vmatpush.bf16.msra.mxu0 0
      %617 = vmatpush.bf16.msra.mxu0 0
      %618 = vmatpush.bf16.msra.mxu0 0
      %619 = vmatpush.bf16.msra.mxu0 0
      %620 = vmatpush.bf16.msra.mxu0 0
      %621 = vmatpush.bf16.msra.mxu0 0
      %622 = vmatpush.bf16.msra.mxu0 %v604
      %623 = vmatmul.bf16.gmra.mxu0 %v610
      %v624 = vpop.f32.mrf.mxu0
      %v625 = vadd.f32 0.0, %v624
      %v626 = vpop.f32.mrf.mxu0
      %v627 = vadd.f32 0.0, %v626
      %628 = vmatmul.bf16.gmra.mxu0 %v613
      %v629 = vpop.f32.mrf.mxu0
      %v630 = vadd.f32 0.0, %v629
      %v631 = vpop.f32.mrf.mxu0
      %v632 = vadd.f32 0.0, %v631
      %633 = vdwg.mxu0
      %634 = vmatpush.bf16.msra.mxu0 0
      %635 = vmatpush.bf16.msra.mxu0 0
      %636 = vmatpush.bf16.msra.mxu0 0
      %637 = vmatpush.bf16.msra.mxu0 0
      %638 = vmatpush.bf16.msra.mxu0 0
      %639 = vmatpush.bf16.msra.mxu0 0
      %640 = vmatpush.bf16.msra.mxu0 0
      %641 = vmatpush.bf16.msra.mxu0 %v605
      %642 = vmatmul.bf16.gmra.mxu0 %v610
      %v643 = vpop.f32.mrf.mxu0
      %v644 = vadd.f32 0.0, %v643
      %v645 = vpop.f32.mrf.mxu0
      %v646 = vadd.f32 0.0, %v645
      %647 = vmatmul.bf16.gmra.mxu0 %v613
      %v648 = vpop.f32.mrf.mxu0
      %v649 = vadd.f32 0.0, %v648
      %v650 = vpop.f32.mrf.mxu0
      %v651 = vadd.f32 0.0, %v650
      %652 = vdwg.mxu0
      %653 = vmatpush.bf16.msra.mxu0 0
      %654 = vmatpush.bf16.msra.mxu0 0
      %655 = vmatpush.bf16.msra.mxu0 0
      %656 = vmatpush.bf16.msra.mxu0 0
      %657 = vmatpush.bf16.msra.mxu0 0
      %658 = vmatpush.bf16.msra.mxu0 0
      %659 = vmatpush.bf16.msra.mxu0 0
      %660 = vmatpush.bf16.msra.mxu0 %v602
      %661 = vmatmul.bf16.gmra.mxu0 %v610
      %v662 = vpop.f32.mrf.mxu0
      %v663 = vadd.f32 0.0, %v662
      %v664 = vpop.f32.mrf.mxu0
      %v665 = vadd.f32 0.0, %v664
      %666 = vmatmul.bf16.gmra.mxu0 %v613
      %v667 = vpop.f32.mrf.mxu0
      %v668 = vadd.f32 0.0, %v667
      %v669 = vpop.f32.mrf.mxu0
      %v670 = vadd.f32 0.0, %v669
      %671 = vdwg.mxu0
      %v672 = vadd.f32 %v575, %v625
      %v673 = vadd.f32 %v576, %v644
      %v674 = vadd.f32 %v577, %v663
      %v675 = vadd.f32 %v578, %v627
      %v676 = vadd.f32 %v579, %v646
      %v677 = vadd.f32 %v580, %v665
      %v678 = vadd.f32 %v581, %v630
      %v679 = vadd.f32 %v582, %v649
      %v680 = vadd.f32 %v583, %v668
      %v681 = vadd.f32 %v584, %v632
      %v682 = vadd.f32 %v585, %v651
      %v683 = vadd.f32 %v586, %v670
      %v688 = vunpack.c.l.b16 %v259
      %v689 = vunpack.c.l.b16 %v260
      %v690 = vunpack.c.l.b16 %v261
      %v691 = vunpack.c.l.b16 %v262
      %v692 = vpack.c.b16 %v689, %v688
      %v693 = vpack.c.b16 %v691, %v690
      %694 = vrot.lane.b32.xlu0 %v335, 109
      %v695 = vpop.permute.xlu0 %694
      %696 = vrot.lane.b32.xlu0 %v336, 109
      %v697 = vpop.permute.xlu0 %696
      %698 = vrot.lane.b32.xlu0 %v337, 109
      %v699 = vpop.permute.xlu0 %698
      %vm700 = vcmask 891904
      %v701 = vsel %vm700, %v695, %v697
      %v702 = vsel %vm700, %v697, %v699
      %v707 = vsel %vm350, %v692, 0
      %v710 = vsel %vm350, %v693, 0
      %712 = vmatpush.bf16.msra.mxu0 0
      %713 = vmatpush.bf16.msra.mxu0 0
      %714 = vmatpush.bf16.msra.mxu0 0
      %715 = vmatpush.bf16.msra.mxu0 0
      %716 = vmatpush.bf16.msra.mxu0 0
      %717 = vmatpush.bf16.msra.mxu0 0
      %718 = vmatpush.bf16.msra.mxu0 0
      %719 = vmatpush.bf16.msra.mxu0 %v701
      %720 = vmatmul.bf16.gmra.mxu0 %v707
      %v721 = vpop.f32.mrf.mxu0
      %v722 = vadd.f32 0.0, %v721
      %v723 = vpop.f32.mrf.mxu0
      %v724 = vadd.f32 0.0, %v723
      %725 = vmatmul.bf16.gmra.mxu0 %v710
      %v726 = vpop.f32.mrf.mxu0
      %v727 = vadd.f32 0.0, %v726
      %v728 = vpop.f32.mrf.mxu0
      %v729 = vadd.f32 0.0, %v728
      %730 = vdwg.mxu0
      %731 = vmatpush.bf16.msra.mxu0 0
      %732 = vmatpush.bf16.msra.mxu0 0
      %733 = vmatpush.bf16.msra.mxu0 0
      %734 = vmatpush.bf16.msra.mxu0 0
      %735 = vmatpush.bf16.msra.mxu0 0
      %736 = vmatpush.bf16.msra.mxu0 0
      %737 = vmatpush.bf16.msra.mxu0 0
      %738 = vmatpush.bf16.msra.mxu0 %v702
      %739 = vmatmul.bf16.gmra.mxu0 %v707
      %v740 = vpop.f32.mrf.mxu0
      %v741 = vadd.f32 0.0, %v740
      %v742 = vpop.f32.mrf.mxu0
      %v743 = vadd.f32 0.0, %v742
      %744 = vmatmul.bf16.gmra.mxu0 %v710
      %v745 = vpop.f32.mrf.mxu0
      %v746 = vadd.f32 0.0, %v745
      %v747 = vpop.f32.mrf.mxu0
      %v748 = vadd.f32 0.0, %v747
      %749 = vdwg.mxu0
      %750 = vmatpush.bf16.msra.mxu0 0
      %751 = vmatpush.bf16.msra.mxu0 0
      %752 = vmatpush.bf16.msra.mxu0 0
      %753 = vmatpush.bf16.msra.mxu0 0
      %754 = vmatpush.bf16.msra.mxu0 0
      %755 = vmatpush.bf16.msra.mxu0 0
      %756 = vmatpush.bf16.msra.mxu0 0
      %757 = vmatpush.bf16.msra.mxu0 %v699
      %758 = vmatmul.bf16.gmra.mxu0 %v707
      %v759 = vpop.f32.mrf.mxu0
      %v760 = vadd.f32 0.0, %v759
      %v761 = vpop.f32.mrf.mxu0
      %v762 = vadd.f32 0.0, %v761
      %763 = vmatmul.bf16.gmra.mxu0 %v710
      %v764 = vpop.f32.mrf.mxu0
      %v765 = vadd.f32 0.0, %v764
      %v766 = vpop.f32.mrf.mxu0
      %v767 = vadd.f32 0.0, %v766
      %768 = vdwg.mxu0
      %v769 = vadd.f32 %v672, %v722
      %v770 = vadd.f32 %v673, %v741
      %v771 = vadd.f32 %v674, %v760
      %v772 = vadd.f32 %v675, %v724
      %v773 = vadd.f32 %v676, %v743
      %v774 = vadd.f32 %v677, %v762
      %v775 = vadd.f32 %v678, %v727
      %v776 = vadd.f32 %v679, %v746
      %v777 = vadd.f32 %v680, %v765
      %v778 = vadd.f32 %v681, %v729
      %v779 = vadd.f32 %v682, %v748
      %v780 = vadd.f32 %v683, %v767
      %v785 = vunpack.c.l.b16 %v264
      %v786 = vunpack.c.l.b16 %v265
      %v787 = vunpack.c.l.b16 %v266
      %v788 = vunpack.c.l.b16 %v267
      %v789 = vpack.c.b16 %v786, %v785
      %v790 = vpack.c.b16 %v788, %v787
      %791 = vrot.lane.b32.xlu0 %v335, 108
      %v792 = vpop.permute.xlu0 %791
      %793 = vrot.lane.b32.xlu0 %v336, 108
      %v794 = vpop.permute.xlu0 %793
      %795 = vrot.lane.b32.xlu0 %v337, 108
      %v796 = vpop.permute.xlu0 %795
      %vm797 = vcmask 883712
      %v798 = vsel %vm797, %v792, %v794
      %v799 = vsel %vm797, %v794, %v796
      %v804 = vsel %vm350, %v789, 0
      %v807 = vsel %vm350, %v790, 0
      %809 = vmatpush.bf16.msra.mxu0 0
      %810 = vmatpush.bf16.msra.mxu0 0
      %811 = vmatpush.bf16.msra.mxu0 0
      %812 = vmatpush.bf16.msra.mxu0 0
      %813 = vmatpush.bf16.msra.mxu0 0
      %814 = vmatpush.bf16.msra.mxu0 0
      %815 = vmatpush.bf16.msra.mxu0 0
      %816 = vmatpush.bf16.msra.mxu0 %v798
      %817 = vmatmul.bf16.gmra.mxu0 %v804
      %v818 = vpop.f32.mrf.mxu0
      %v819 = vadd.f32 0.0, %v818
      %v820 = vpop.f32.mrf.mxu0
      %v821 = vadd.f32 0.0, %v820
      %822 = vmatmul.bf16.gmra.mxu0 %v807
      %v823 = vpop.f32.mrf.mxu0
      %v824 = vadd.f32 0.0, %v823
      %v825 = vpop.f32.mrf.mxu0
      %v826 = vadd.f32 0.0, %v825
      %827 = vdwg.mxu0
      %828 = vmatpush.bf16.msra.mxu0 0
      %829 = vmatpush.bf16.msra.mxu0 0
      %830 = vmatpush.bf16.msra.mxu0 0
      %831 = vmatpush.bf16.msra.mxu0 0
      %832 = vmatpush.bf16.msra.mxu0 0
      %833 = vmatpush.bf16.msra.mxu0 0
      %834 = vmatpush.bf16.msra.mxu0 0
      %835 = vmatpush.bf16.msra.mxu0 %v799
      %836 = vmatmul.bf16.gmra.mxu0 %v804
      %v837 = vpop.f32.mrf.mxu0
      %v838 = vadd.f32 0.0, %v837
      %v839 = vpop.f32.mrf.mxu0
      %v840 = vadd.f32 0.0, %v839
      %841 = vmatmul.bf16.gmra.mxu0 %v807
      %v842 = vpop.f32.mrf.mxu0
      %v843 = vadd.f32 0.0, %v842
      %v844 = vpop.f32.mrf.mxu0
      %v845 = vadd.f32 0.0, %v844
      %846 = vdwg.mxu0
      %847 = vmatpush.bf16.msra.mxu0 0
      %848 = vmatpush.bf16.msra.mxu0 0
      %849 = vmatpush.bf16.msra.mxu0 0
      %850 = vmatpush.bf16.msra.mxu0 0
      %851 = vmatpush.bf16.msra.mxu0 0
      %852 = vmatpush.bf16.msra.mxu0 0
      %853 = vmatpush.bf16.msra.mxu0 0
      %854 = vmatpush.bf16.msra.mxu0 %v796
      %855 = vmatmul.bf16.gmra.mxu0 %v804
      %v856 = vpop.f32.mrf.mxu0
      %v857 = vadd.f32 0.0, %v856
      %v858 = vpop.f32.mrf.mxu0
      %v859 = vadd.f32 0.0, %v858
      %860 = vmatmul.bf16.gmra.mxu0 %v807
      %v861 = vpop.f32.mrf.mxu0
      %v862 = vadd.f32 0.0, %v861
      %v863 = vpop.f32.mrf.mxu0
      %v864 = vadd.f32 0.0, %v863
      %865 = vdwg.mxu0
      %v866 = vadd.f32 %v769, %v819
      %v867 = vadd.f32 %v770, %v838
      %v868 = vadd.f32 %v771, %v857
      %v869 = vadd.f32 %v772, %v821
      %v870 = vadd.f32 %v773, %v840
      %v871 = vadd.f32 %v774, %v859
      %v872 = vadd.f32 %v775, %v824
      %v873 = vadd.f32 %v776, %v843
      %v874 = vadd.f32 %v777, %v862
      %v875 = vadd.f32 %v778, %v826
      %v876 = vadd.f32 %v779, %v845
      %v877 = vadd.f32 %v780, %v864
      %v882 = vunpack.c.l.b16 %v269
      %v883 = vunpack.c.l.b16 %v270
      %v884 = vunpack.c.l.b16 %v271
      %v885 = vunpack.c.l.b16 %v272
      %v886 = vpack.c.b16 %v883, %v882
      %v887 = vpack.c.b16 %v885, %v884
      %888 = vrot.lane.b32.xlu0 %v335, 92
      %v889 = vpop.permute.xlu0 %888
      %890 = vrot.lane.b32.xlu0 %v336, 92
      %v891 = vpop.permute.xlu0 %890
      %892 = vrot.lane.b32.xlu0 %v337, 92
      %v893 = vpop.permute.xlu0 %892
      %vm894 = vcmask 752640
      %v895 = vsel %vm894, %v889, %v891
      %v896 = vsel %vm894, %v891, %v893
      %v901 = vsel %vm350, %v886, 0
      %v904 = vsel %vm350, %v887, 0
      %906 = vmatpush.bf16.msra.mxu0 0
      %907 = vmatpush.bf16.msra.mxu0 0
      %908 = vmatpush.bf16.msra.mxu0 0
      %909 = vmatpush.bf16.msra.mxu0 0
      %910 = vmatpush.bf16.msra.mxu0 0
      %911 = vmatpush.bf16.msra.mxu0 0
      %912 = vmatpush.bf16.msra.mxu0 0
      %913 = vmatpush.bf16.msra.mxu0 %v895
      %914 = vmatmul.bf16.gmra.mxu0 %v901
      %v915 = vpop.f32.mrf.mxu0
      %v916 = vadd.f32 0.0, %v915
      %v917 = vpop.f32.mrf.mxu0
      %v918 = vadd.f32 0.0, %v917
      %919 = vmatmul.bf16.gmra.mxu0 %v904
      %v920 = vpop.f32.mrf.mxu0
      %v921 = vadd.f32 0.0, %v920
      %v922 = vpop.f32.mrf.mxu0
      %v923 = vadd.f32 0.0, %v922
      %924 = vdwg.mxu0
      %925 = vmatpush.bf16.msra.mxu0 0
      %926 = vmatpush.bf16.msra.mxu0 0
      %927 = vmatpush.bf16.msra.mxu0 0
      %928 = vmatpush.bf16.msra.mxu0 0
      %929 = vmatpush.bf16.msra.mxu0 0
      %930 = vmatpush.bf16.msra.mxu0 0
      %931 = vmatpush.bf16.msra.mxu0 0
      %932 = vmatpush.bf16.msra.mxu0 %v896
      %933 = vmatmul.bf16.gmra.mxu0 %v901
      %v934 = vpop.f32.mrf.mxu0
      %v935 = vadd.f32 0.0, %v934
      %v936 = vpop.f32.mrf.mxu0
      %v937 = vadd.f32 0.0, %v936
      %938 = vmatmul.bf16.gmra.mxu0 %v904
      %v939 = vpop.f32.mrf.mxu0
      %v940 = vadd.f32 0.0, %v939
      %v941 = vpop.f32.mrf.mxu0
      %v942 = vadd.f32 0.0, %v941
      %943 = vdwg.mxu0
      %944 = vmatpush.bf16.msra.mxu0 0
      %945 = vmatpush.bf16.msra.mxu0 0
      %946 = vmatpush.bf16.msra.mxu0 0
      %947 = vmatpush.bf16.msra.mxu0 0
      %948 = vmatpush.bf16.msra.mxu0 0
      %949 = vmatpush.bf16.msra.mxu0 0
      %950 = vmatpush.bf16.msra.mxu0 0
      %951 = vmatpush.bf16.msra.mxu0 %v893
      %952 = vmatmul.bf16.gmra.mxu0 %v901
      %v953 = vpop.f32.mrf.mxu0
      %v954 = vadd.f32 0.0, %v953
      %v955 = vpop.f32.mrf.mxu0
      %v956 = vadd.f32 0.0, %v955
      %957 = vmatmul.bf16.gmra.mxu0 %v904
      %v958 = vpop.f32.mrf.mxu0
      %v959 = vadd.f32 0.0, %v958
      %v960 = vpop.f32.mrf.mxu0
      %v961 = vadd.f32 0.0, %v960
      %962 = vdwg.mxu0
      %v963 = vadd.f32 %v866, %v916
      %v964 = vadd.f32 %v867, %v935
      %v965 = vadd.f32 %v868, %v954
      %v966 = vadd.f32 %v869, %v918
      %v967 = vadd.f32 %v870, %v937
      %v968 = vadd.f32 %v871, %v956
      %v969 = vadd.f32 %v872, %v921
      %v970 = vadd.f32 %v873, %v940
      %v971 = vadd.f32 %v874, %v959
      %v972 = vadd.f32 %v875, %v923
      %v973 = vadd.f32 %v876, %v942
      %v974 = vadd.f32 %v877, %v961
      %v979 = vunpack.c.l.b16 %v274
      %v980 = vunpack.c.l.b16 %v275
      %v981 = vunpack.c.l.b16 %v276
      %v982 = vunpack.c.l.b16 %v277
      %v983 = vpack.c.b16 %v980, %v979
      %v984 = vpack.c.b16 %v982, %v981
      %985 = vrot.lane.b32.xlu0 %v335, 91
      %v986 = vpop.permute.xlu0 %985
      %987 = vrot.lane.b32.xlu0 %v336, 91
      %v988 = vpop.permute.xlu0 %987
      %989 = vrot.lane.b32.xlu0 %v337, 91
      %v990 = vpop.permute.xlu0 %989
      %vm991 = vcmask 744448
      %v992 = vsel %vm991, %v986, %v988
      %v993 = vsel %vm991, %v988, %v990
      %v998 = vsel %vm350, %v983, 0
      %v1001 = vsel %vm350, %v984, 0
      %1003 = vmatpush.bf16.msra.mxu0 0
      %1004 = vmatpush.bf16.msra.mxu0 0
      %1005 = vmatpush.bf16.msra.mxu0 0
      %1006 = vmatpush.bf16.msra.mxu0 0
      %1007 = vmatpush.bf16.msra.mxu0 0
      %1008 = vmatpush.bf16.msra.mxu0 0
      %1009 = vmatpush.bf16.msra.mxu0 0
      %1010 = vmatpush.bf16.msra.mxu0 %v992
      %1011 = vmatmul.bf16.gmra.mxu0 %v998
      %v1012 = vpop.f32.mrf.mxu0
      %v1013 = vadd.f32 0.0, %v1012
      %v1014 = vpop.f32.mrf.mxu0
      %v1015 = vadd.f32 0.0, %v1014
      %1016 = vmatmul.bf16.gmra.mxu0 %v1001
      %v1017 = vpop.f32.mrf.mxu0
      %v1018 = vadd.f32 0.0, %v1017
      %v1019 = vpop.f32.mrf.mxu0
      %v1020 = vadd.f32 0.0, %v1019
      %1021 = vdwg.mxu0
      %1022 = vmatpush.bf16.msra.mxu0 0
      %1023 = vmatpush.bf16.msra.mxu0 0
      %1024 = vmatpush.bf16.msra.mxu0 0
      %1025 = vmatpush.bf16.msra.mxu0 0
      %1026 = vmatpush.bf16.msra.mxu0 0
      %1027 = vmatpush.bf16.msra.mxu0 0
      %1028 = vmatpush.bf16.msra.mxu0 0
      %1029 = vmatpush.bf16.msra.mxu0 %v993
      %1030 = vmatmul.bf16.gmra.mxu0 %v998
      %v1031 = vpop.f32.mrf.mxu0
      %v1032 = vadd.f32 0.0, %v1031
      %v1033 = vpop.f32.mrf.mxu0
      %v1034 = vadd.f32 0.0, %v1033
      %1035 = vmatmul.bf16.gmra.mxu0 %v1001
      %v1036 = vpop.f32.mrf.mxu0
      %v1037 = vadd.f32 0.0, %v1036
      %v1038 = vpop.f32.mrf.mxu0
      %v1039 = vadd.f32 0.0, %v1038
      %1040 = vdwg.mxu0
      %1041 = vmatpush.bf16.msra.mxu0 0
      %1042 = vmatpush.bf16.msra.mxu0 0
      %1043 = vmatpush.bf16.msra.mxu0 0
      %1044 = vmatpush.bf16.msra.mxu0 0
      %1045 = vmatpush.bf16.msra.mxu0 0
      %1046 = vmatpush.bf16.msra.mxu0 0
      %1047 = vmatpush.bf16.msra.mxu0 0
      %1048 = vmatpush.bf16.msra.mxu0 %v990
      %1049 = vmatmul.bf16.gmra.mxu0 %v998
      %v1050 = vpop.f32.mrf.mxu0
      %v1051 = vadd.f32 0.0, %v1050
      %v1052 = vpop.f32.mrf.mxu0
      %v1053 = vadd.f32 0.0, %v1052
      %1054 = vmatmul.bf16.gmra.mxu0 %v1001
      %v1055 = vpop.f32.mrf.mxu0
      %v1056 = vadd.f32 0.0, %v1055
      %v1057 = vpop.f32.mrf.mxu0
      %v1058 = vadd.f32 0.0, %v1057
      %1059 = vdwg.mxu0
      %v1060 = vadd.f32 %v963, %v1013
      %v1061 = vadd.f32 %v964, %v1032
      %v1062 = vadd.f32 %v965, %v1051
      %v1063 = vadd.f32 %v966, %v1015
      %v1064 = vadd.f32 %v967, %v1034
      %v1065 = vadd.f32 %v968, %v1053
      %v1066 = vadd.f32 %v969, %v1018
      %v1067 = vadd.f32 %v970, %v1037
      %v1068 = vadd.f32 %v971, %v1056
      %v1069 = vadd.f32 %v972, %v1020
      %v1070 = vadd.f32 %v973, %v1039
      %v1071 = vadd.f32 %v974, %v1058
      %v1076 = vunpack.c.l.b16 %v279
      %v1077 = vunpack.c.l.b16 %v280
      %v1078 = vunpack.c.l.b16 %v281
      %v1079 = vunpack.c.l.b16 %v282
      %v1080 = vpack.c.b16 %v1077, %v1076
      %v1081 = vpack.c.b16 %v1079, %v1078
      %1082 = vrot.lane.b32.xlu0 %v335, 90
      %v1083 = vpop.permute.xlu0 %1082
      %1084 = vrot.lane.b32.xlu0 %v336, 90
      %v1085 = vpop.permute.xlu0 %1084
      %1086 = vrot.lane.b32.xlu0 %v337, 90
      %v1087 = vpop.permute.xlu0 %1086
      %vm1088 = vcmask 736256
      %v1089 = vsel %vm1088, %v1083, %v1085
      %v1090 = vsel %vm1088, %v1085, %v1087
      %v1095 = vsel %vm350, %v1080, 0
      %v1098 = vsel %vm350, %v1081, 0
      %1100 = vmatpush.bf16.msra.mxu0 0
      %1101 = vmatpush.bf16.msra.mxu0 0
      %1102 = vmatpush.bf16.msra.mxu0 0
      %1103 = vmatpush.bf16.msra.mxu0 0
      %1104 = vmatpush.bf16.msra.mxu0 0
      %1105 = vmatpush.bf16.msra.mxu0 0
      %1106 = vmatpush.bf16.msra.mxu0 0
      %1107 = vmatpush.bf16.msra.mxu0 %v1089
      %1108 = vmatmul.bf16.gmra.mxu0 %v1095
      %v1109 = vpop.f32.mrf.mxu0
      %v1110 = vadd.f32 0.0, %v1109
      %v1111 = vpop.f32.mrf.mxu0
      %v1112 = vadd.f32 0.0, %v1111
      %1113 = vmatmul.bf16.gmra.mxu0 %v1098
      %v1114 = vpop.f32.mrf.mxu0
      %v1115 = vadd.f32 0.0, %v1114
      %v1116 = vpop.f32.mrf.mxu0
      %v1117 = vadd.f32 0.0, %v1116
      %1118 = vdwg.mxu0
      %1119 = vmatpush.bf16.msra.mxu0 0
      %1120 = vmatpush.bf16.msra.mxu0 0
      %1121 = vmatpush.bf16.msra.mxu0 0
      %1122 = vmatpush.bf16.msra.mxu0 0
      %1123 = vmatpush.bf16.msra.mxu0 0
      %1124 = vmatpush.bf16.msra.mxu0 0
      %1125 = vmatpush.bf16.msra.mxu0 0
      %1126 = vmatpush.bf16.msra.mxu0 %v1090
      %1127 = vmatmul.bf16.gmra.mxu0 %v1095
      %v1128 = vpop.f32.mrf.mxu0
      %v1129 = vadd.f32 0.0, %v1128
      %v1130 = vpop.f32.mrf.mxu0
      %v1131 = vadd.f32 0.0, %v1130
      %1132 = vmatmul.bf16.gmra.mxu0 %v1098
      %v1133 = vpop.f32.mrf.mxu0
      %v1134 = vadd.f32 0.0, %v1133
      %v1135 = vpop.f32.mrf.mxu0
      %v1136 = vadd.f32 0.0, %v1135
      %1137 = vdwg.mxu0
      %1138 = vmatpush.bf16.msra.mxu0 0
      %1139 = vmatpush.bf16.msra.mxu0 0
      %1140 = vmatpush.bf16.msra.mxu0 0
      %1141 = vmatpush.bf16.msra.mxu0 0
      %1142 = vmatpush.bf16.msra.mxu0 0
      %1143 = vmatpush.bf16.msra.mxu0 0
      %1144 = vmatpush.bf16.msra.mxu0 0
      %1145 = vmatpush.bf16.msra.mxu0 %v1087
      %1146 = vmatmul.bf16.gmra.mxu0 %v1095
      %v1147 = vpop.f32.mrf.mxu0
      %v1148 = vadd.f32 0.0, %v1147
      %v1149 = vpop.f32.mrf.mxu0
      %v1150 = vadd.f32 0.0, %v1149
      %1151 = vmatmul.bf16.gmra.mxu0 %v1098
      %v1152 = vpop.f32.mrf.mxu0
      %v1153 = vadd.f32 0.0, %v1152
      %v1154 = vpop.f32.mrf.mxu0
      %v1155 = vadd.f32 0.0, %v1154
      %1156 = vdwg.mxu0
      %v1157 = vadd.f32 %v1060, %v1110
      %v1158 = vadd.f32 %v1061, %v1129
      %v1159 = vadd.f32 %v1062, %v1148
      %v1160 = vadd.f32 %v1063, %v1112
      %v1161 = vadd.f32 %v1064, %v1131
      %v1162 = vadd.f32 %v1065, %v1150
      %v1163 = vadd.f32 %v1066, %v1115
      %v1164 = vadd.f32 %v1067, %v1134
      %v1165 = vadd.f32 %v1068, %v1153
      %v1166 = vadd.f32 %v1069, %v1117
      %v1167 = vadd.f32 %v1070, %v1136
      %v1168 = vadd.f32 %v1071, %v1155
      %v1169 = vld [vmem:[%s232] sm:$0xff]
      %v1170 = vld [vmem:[%s232 + $0x8] sm:$0xff]
      %v1171 = vld [vmem:[%s232 + $0x10] sm:$0xff]
      %v1172 = vld [vmem:[%s232 + $0x18] sm:$0xff]
      %1174 = vset.pattern.permute.xlu0 0
      %1175 = vperm.xlu0 %1174, %v1169
      %v1176 = vpop.permute.xlu0 %1175
      %1179 = vset.pattern.permute.xlu0 0
      %1180 = vperm.xlu0 %1179, %v1170
      %v1181 = vpop.permute.xlu0 %1180
      %1184 = vset.pattern.permute.xlu0 0
      %1185 = vperm.xlu0 %1184, %v1171
      %v1186 = vpop.permute.xlu0 %1185
      %1189 = vset.pattern.permute.xlu0 0
      %1190 = vperm.xlu0 %1189, %v1172
      %v1191 = vpop.permute.xlu0 %1190
      %v1193 = vmul.f32 %v1157, %v1176
      %v1194 = vmul.f32 %v1158, %v1176
      %v1195 = vmul.f32 %v1159, %v1176
      %v1196 = vmul.f32 %v1160, %v1181
      %v1197 = vmul.f32 %v1161, %v1181
      %v1198 = vmul.f32 %v1162, %v1181
      %v1199 = vmul.f32 %v1163, %v1186
      %v1200 = vmul.f32 %v1164, %v1186
      %v1201 = vmul.f32 %v1165, %v1186
      %v1202 = vmul.f32 %v1166, %v1191
      %v1203 = vmul.f32 %v1167, %v1191
      %v1204 = vmul.f32 %v1168, %v1191
      %1205 = vst [vmem:[%s237] sm:$0xff] %v1193
      %1206 = vst [vmem:[%s237 + $0x8] sm:$0xff] %v1194
      %vm1207 = vcmask 261120
      %1208 = vst.msk [vmem:[%s237 + $0x10] sm:$0xff] %vm1207, %v1195
      %1209 = vst [vmem:[%s237 + $0x18] sm:$0xff] %v1196
      %1210 = vst [vmem:[%s237 + $0x20] sm:$0xff] %v1197
      %1211 = vst.msk [vmem:[%s237 + $0x28] sm:$0xff] %vm1207, %v1198
      %1212 = vst [vmem:[%s237 + $0x30] sm:$0xff] %v1199
      %1213 = vst [vmem:[%s237 + $0x38] sm:$0xff] %v1200
      %1214 = vst.msk [vmem:[%s237 + $0x40] sm:$0xff] %vm1207, %v1201
      %1215 = vst [vmem:[%s237 + $0x48] sm:$0xff] %v1202
      %1216 = vst [vmem:[%s237 + $0x50] sm:$0xff] %v1203
      %1217 = vst.msk [vmem:[%s237 + $0x58] sm:$0xff] %vm1207, %v1204
      %p1218 = scmp.lt.s32.totalorder %s15, 1
      %s1219 = scalar_select %p1218, %s15, 1
      %s1220 = smul.addr %s1219, 12
      %s1221 = smul.addr %s1220, 8
      %s1222 = scalar_lea.vmem %s4, %s1221
      // Predicated region
      $region37: #{modulated_conv2d.1} parent=35 // pred_check
        %p1223 = pneg %p132
      $region38: #{modulated_conv2d.1} parent=35 // pred_check_branch
        %1225 = sbr.rel (%p1223) target = $region40
      $region39: #{modulated_conv2d.1} parent=35 // pred_region
        _
      $region40: #{modulated_conv2d.1} parent=35 // pred_fallthru
        _
    $region36: #{modulated_conv2d.1} parent=5 // pred_fallthru
      _
    %p1226 = scmp.le.s32.totalorder 2, %s10
    // Predicated region
    $region41: #{modulated_conv2d.1} parent=5 // pred_check
      %p1227 = pneg %p1226
    $region42: #{modulated_conv2d.1} parent=5 // pred_check_branch
      %1229 = sbr.rel (%p1227) target = $region44
    $region43: #{modulated_conv2d.1} parent=5 // pred_region
      %s1230 = ssub.s32 %s10, 2
      // Predicated region
      $region45: #{modulated_conv2d.1} parent=43 // pred_check
        %p1231 = pneg %p138
      $region46: #{modulated_conv2d.1} parent=43 // pred_check_branch
        %1233 = sbr.rel (%p1231) target = $region48
      $region47: #{modulated_conv2d.1} parent=43 // pred_region
        %p1234 = scmp.lt.s32.totalorder %s16, 1
        %s1235 = scalar_select %p1234, %s16, 1
        %s1236 = smul.addr %s1235, 12
        %s1237 = smul.addr %s1236, 8
        %s1238 = scalar_lea.vmem %s4, %s1237
      $region48: #{modulated_conv2d.1} parent=43 // pred_fallthru
        _
    $region44: #{modulated_conv2d.1} parent=5 // pred_fallthru
      _
  $region6: #{modulated_conv2d.1} parent=0 // loop_footer
    %s14 = sadd.s32 1, %s10
  $region7: #{modulated_conv2d.1} parent=0 // loop_footer_branch
    %9 = sbr.rel target = $region3
  $region8: #{modulated_conv2d.1} parent=0 // loop_exit
    _

</llo_original>
